<compile_context>
chip_gen: v5e
topology: v5e:2x2
jax: 0.10.0
libtpu: 0.0.40
codegen_flags: <defaults>
</compile_context>

<pallas_src>
import jax
import jax.numpy as jnp
import numpy as np
from jax import lax
from jax.experimental import pallas as pl
from jax.experimental.pallas import tpu as pltpu


def _round_up(x, m):
    return (x + m - 1) // m * m


def fused_embed_posenc_linear_kernel(ids_ref, tbl_ref, pe_ref, w_ref, b_ref, o_ref):
    """One tile of TM flattened (batch*seq) rows.

    ids_ref: (TM, 1)   int32   token ids for this row tile
    tbl_ref: (Vp, Dp)  bf16    embedding table (zero padded, grid-invariant)
    pe_ref : (TM, Dp)  f32     positional-encoding rows for this tile
    w_ref  : (Dp, Vp)  bf16    output-layer weight (transposed vs torch Linear)
    b_ref  : (1, Vp)   f32     output-layer bias
    o_ref  : (TM, Vp)  f32     logits
    """
    tm = ids_ref.shape[0]
    vp = tbl_ref.shape[0]

    # Fused embedding gather as a one-hot matmul on the MXU (exact row picks;
    # keeps the (M, D) activations out of HBM entirely).
    # TODO(synk): for large vocabularies replace the one-hot matmul with a
    # scalar-prefetch / manual-DMA row gather.
    eq = ids_ref[...] == lax.broadcasted_iota(jnp.int32, (tm, vp), 1)   # (TM, Vp)
    onehot = jnp.where(eq, 1.0, 0.0).astype(tbl_ref.dtype)              # bf16
    emb = jnp.dot(onehot, tbl_ref[...],
                  preferred_element_type=jnp.float32)                   # (TM, Dp) f32

    # Positional-encoding add in f32 on the VPU (no bf16 elementwise math).
    x = emb + pe_ref[...]                                               # (TM, Dp) f32

    # Output projection: bf16 MXU operands, f32 accumulation, f32 epilogue,
    # lane-dense (Vp multiple of 128) unmasked stores.
    logits = jnp.dot(x.astype(w_ref.dtype), w_ref[...],
                     preferred_element_type=jnp.float32)                # (TM, Vp) f32
    o_ref[...] = logits + b_ref[...]


def positional_model_forward(token_ids, emb_table, pe, w, b, *, tm=128):
    """token_ids: (B, S) int32 -> logits (B, S, V) float32."""
    B, S = token_ids.shape
    V, D = emb_table.shape
    M = B * S

    Dp = _round_up(D, 128)                 # lane-dense reduction dim
    Vp = _round_up(V, 128)                 # lane-dense output dim
    TM = min(tm, _round_up(M, 8))          # row tile (128 for realistic M)
    Mp = _round_up(M, TM)

    # Parameter / index prep (glue): zero-pad to aligned shapes, bf16 MXU operands.
    ids = jnp.pad(token_ids.reshape(M).astype(jnp.int32), (0, Mp - M)).reshape(Mp, 1)
    tbl = jnp.pad(emb_table, ((0, Vp - V), (0, Dp - D))).astype(jnp.bfloat16)
    pe_rows = jnp.pad(pe[:S, :], ((0, 0), (0, Dp - D)))                 # (S, Dp) f32
    pe_flat = jnp.pad(jnp.tile(pe_rows, (B, 1)), ((0, Mp - M), (0, 0))) # (Mp, Dp) f32
    w_p = jnp.pad(w, ((0, Dp - D), (0, Vp - V))).astype(jnp.bfloat16)   # (Dp, Vp)
    b_p = jnp.pad(b, (0, Vp - V)).reshape(1, Vp).astype(jnp.float32)    # (1, Vp)

    grid = (Mp // TM,)

    flops = 4 * Mp * Dp * Vp               # gather matmul + output matmul
    bytes_accessed = (ids.size * 4 + tbl.size * 2 + pe_flat.size * 4
                      + w_p.size * 2 + b_p.size * 4 + Mp * Vp * 4)

    out = pl.pallas_call(
        fused_embed_posenc_linear_kernel,
        out_shape=jax.ShapeDtypeStruct((Mp, Vp), jnp.float32),
        grid_spec=pltpu.PrefetchScalarGridSpec(
            num_scalar_prefetch=0,
            grid=grid,
            in_specs=[
                pl.BlockSpec((TM, 1), lambda i: (i, 0)),    # token ids per tile
                pl.BlockSpec((Vp, Dp), lambda i: (0, 0)),   # embedding table (resident)
                pl.BlockSpec((TM, Dp), lambda i: (i, 0)),   # positional encoding rows
                pl.BlockSpec((Dp, Vp), lambda i: (0, 0)),   # output weight (resident)
                pl.BlockSpec((1, Vp), lambda i: (0, 0)),    # bias (resident)
            ],
            out_specs=pl.BlockSpec((TM, Vp), lambda i: (i, 0)),
        ),
        compiler_params=pltpu.CompilerParams(
            dimension_semantics=("parallel",)),             # shard M tiles across TCs
        cost_estimate=pl.CostEstimate(flops=flops, transcendentals=0,
                                      bytes_accessed=bytes_accessed),
    )(ids, tbl, pe_flat, w_p, b_p)

    return out[:M, :V].reshape(B, S, V)


def make_positional_encoding(max_len, d_model):
    """Matches the PyTorch PositionalEncoding buffer construction."""
    pos = np.arange(max_len, dtype=np.float32)[:, None]
    div_term = np.exp(np.arange(0, d_model, 2, dtype=np.float32)
                      * (-np.log(10000.0) / d_model))
    pe = np.zeros((max_len, d_model), dtype=np.float32)
    pe[:, 0::2] = np.sin(pos * div_term)
    pe[:, 1::2] = np.cos(pos * div_term)
    return jnp.asarray(pe)


if __name__ == "__main__":
    vocab_size = 64
    d_model = 32
    batch = 2
    seq = 8
    max_len = 128  # only the first `seq` rows are used

    key = jax.random.PRNGKey(0)
    k_ids, k_emb, k_w, k_b = jax.random.split(key, 4)

    # Deterministic synthetic parameters (shapes match nn.Embedding / nn.Linear).
    emb_table = jax.random.normal(k_emb, (vocab_size, d_model), dtype=jnp.float32)
    w = jax.random.normal(k_w, (d_model, vocab_size), dtype=jnp.float32) * 0.05
    b = jax.random.normal(k_b, (vocab_size,), dtype=jnp.float32) * 0.01
    pe = make_positional_encoding(max_len, d_model)

    token_ids = jax.random.randint(k_ids, (batch, seq), 0, vocab_size, dtype=jnp.int32)

    # TODO(synk): dropout (p=0.1) is a no-op here (eval-mode semantics); training
    # mode would draw a mask with pltpu.prng_* inside the kernel.

    logits = positional_model_forward(token_ids, emb_table, pe, w, b)
    jax.block_until_ready(logits)

    # Sanity check against a pure-f32 JAX reference (bf16 MXU operands => loose tol).
    ref = jnp.take(emb_table, token_ids, axis=0) + pe[:seq][None]
    ref = ref @ w + b
    np.testing.assert_allclose(np.asarray(logits), np.asarray(ref),
                               rtol=3e-2, atol=3e-2)

    # generate_text equivalent (glue): argmax over vocab.
    _ = jnp.argmax(logits, axis=-1)

    print("KERNEL_OK")
</pallas_src>

<mosaic_0001>
module attributes {stable_mosaic.version = 11 : i64} {
  func.func @fused_embed_posenc_linear_kernel(%arg0: i32, %arg1: memref<16x1xi32, #tpu.memory_space<vmem>>, %arg2: memref<128x128xbf16, #tpu.memory_space<vmem>>, %arg3: memref<16x128xf32, #tpu.memory_space<vmem>>, %arg4: memref<128x128xbf16, #tpu.memory_space<vmem>>, %arg5: memref<1x128xf32, #tpu.memory_space<vmem>>, %arg6: memref<16x128xf32, #tpu.memory_space<vmem>>) attributes {dimension_semantics = [#tpu.dimension_semantics<parallel>], iteration_bounds = array<i64: 1>, scalar_prefetch = 0 : i64, scratch_operands = 0 : i64, tpu.core_type = #tpu.core_type<tc>, window_params = [{transform_indices = @transform_0, window_bounds = array<i64: 16, 1>}, {pipeline_mode = #tpu.pipeline_mode<synchronous>, transform_indices = @transform_1, window_bounds = array<i64: 128, 128>}, {transform_indices = @transform_2, window_bounds = array<i64: 16, 128>}, {pipeline_mode = #tpu.pipeline_mode<synchronous>, transform_indices = @transform_3, window_bounds = array<i64: 128, 128>}, {pipeline_mode = #tpu.pipeline_mode<synchronous>, transform_indices = @transform_4, window_bounds = array<i64: 1, 128>}, {transform_indices = @transform_5, window_bounds = array<i64: 16, 128>}]} {
    %c0 = arith.constant 0 : index
    %c0_0 = arith.constant 0 : index
    %0 = vector.load %arg1[%c0, %c0_0] : memref<16x1xi32, #tpu.memory_space<vmem>>, vector<16x1xi32>
    %1 = tpu.iota {dimensions = array<i32: 1>} : vector<16x128xi32>
    %2 = vector.broadcast %0 : vector<16x1xi32> to vector<16x128xi32>
    %3 = arith.cmpi eq, %2, %1 : vector<16x128xi32>
    %cst = arith.constant 1.000000e+00 : f32
    %cst_1 = arith.constant 0.000000e+00 : f32
    %4 = vector.broadcast %cst : f32 to vector<16x128xf32>
    %5 = vector.broadcast %cst_1 : f32 to vector<16x128xf32>
    %6 = arith.select %3, %4, %5 : vector<16x128xi1>, vector<16x128xf32>
    %7 = arith.truncf %6 : vector<16x128xf32> to vector<16x128xbf16>
    %c0_2 = arith.constant 0 : index
    %c0_3 = arith.constant 0 : index
    %8 = vector.load %arg2[%c0_2, %c0_3] : memref<128x128xbf16, #tpu.memory_space<vmem>>, vector<128x128xbf16>
    %cst_4 = arith.constant dense<0.000000e+00> : vector<16x128xf32>
    %9 = tpu.matmul %7, %8, %cst_4 {dimension_numbers = #tpu.dot_dimension_numbers<[1], [0], [0], [1], [0, 0, 1, 1], [], []>} : vector<16x128xbf16>, vector<128x128xbf16>, vector<16x128xf32> -> vector<16x128xf32>
    %c0_5 = arith.constant 0 : index
    %c0_6 = arith.constant 0 : index
    %10 = vector.load %arg3[%c0_5, %c0_6] : memref<16x128xf32, #tpu.memory_space<vmem>>, vector<16x128xf32>
    %11 = arith.addf %9, %10 : vector<16x128xf32>
    %12 = arith.truncf %11 : vector<16x128xf32> to vector<16x128xbf16>
    %c0_7 = arith.constant 0 : index
    %c0_8 = arith.constant 0 : index
    %13 = vector.load %arg4[%c0_7, %c0_8] : memref<128x128xbf16, #tpu.memory_space<vmem>>, vector<128x128xbf16>
    %cst_9 = arith.constant dense<0.000000e+00> : vector<16x128xf32>
    %14 = tpu.matmul %12, %13, %cst_9 {dimension_numbers = #tpu.dot_dimension_numbers<[1], [0], [0], [1], [0, 0, 1, 1], [], []>} : vector<16x128xbf16>, vector<128x128xbf16>, vector<16x128xf32> -> vector<16x128xf32>
    %c0_10 = arith.constant 0 : index
    %c0_11 = arith.constant 0 : index
    %15 = vector.load %arg5[%c0_10, %c0_11] : memref<1x128xf32, #tpu.memory_space<vmem>>, vector<1x128xf32>
    %16 = vector.broadcast %15 : vector<1x128xf32> to vector<16x128xf32>
    %17 = arith.addf %14, %16 : vector<16x128xf32>
    %c0_12 = arith.constant 0 : index
    %c0_13 = arith.constant 0 : index
    %18 = vector.load %arg6[%c0_12, %c0_13] : memref<16x128xf32, #tpu.memory_space<vmem>>, vector<16x128xf32>
    tpu.vector_store %arg6[%c0_12, %c0_13], %17 {strides = array<i32>} : memref<16x128xf32, #tpu.memory_space<vmem>>, vector<16x128xf32>,
    return
  }
  func.func @transform_0(%arg0: i32) -> (i32, i32) {
    %c0_i32 = arith.constant 0 : i32
    %c0_i32_0 = arith.constant 0 : i32
    return %arg0, %c0_i32 : i32, i32
  }
  func.func @transform_1(%arg0: i32) -> (i32, i32) {
    %c0_i32 = arith.constant 0 : i32
    %c0_i32_0 = arith.constant 0 : i32
    %c0_i32_1 = arith.constant 0 : i32
    return %c0_i32, %c0_i32_0 : i32, i32
  }
  func.func @transform_2(%arg0: i32) -> (i32, i32) {
    %c0_i32 = arith.constant 0 : i32
    %c0_i32_0 = arith.constant 0 : i32
    return %arg0, %c0_i32 : i32, i32
  }
  func.func @transform_3(%arg0: i32) -> (i32, i32) {
    %c0_i32 = arith.constant 0 : i32
    %c0_i32_0 = arith.constant 0 : i32
    %c0_i32_1 = arith.constant 0 : i32
    return %c0_i32, %c0_i32_0 : i32, i32
  }
  func.func @transform_4(%arg0: i32) -> (i32, i32) {
    %c0_i32 = arith.constant 0 : i32
    %c0_i32_0 = arith.constant 0 : i32
    %c0_i32_1 = arith.constant 0 : i32
    return %c0_i32, %c0_i32_0 : i32, i32
  }
  func.func @transform_5(%arg0: i32) -> (i32, i32) {
    %c0_i32 = arith.constant 0 : i32
    %c0_i32_0 = arith.constant 0 : i32
    return %arg0, %c0_i32 : i32, i32
  }
}

</mosaic_0001>

<llo_original>
// kernel: tpu_custom_call.1
$region0: #{tpu_custom_call.1}
  #allocation0 [shape = 'u32[]', space=smem, size = 0x4, offset = 0x4, fixed_abs, tag = 'smem constant byte address 0x4 - core index']
  #allocation1 [shape = 'u32[72,128]{1,0:T(1,128)}', space=vmem, size = 0x9000, scoped, tag = 'internal scratch']
  %s0 = inlined_call_operand.vmem [shape: s32[16,1], index: 0, kind: input, shape index: {}]
  %s1 = inlined_call_operand.hbm [shape: bf16[128,128], index: 1, kind: input, shape index: {}]
  %s2 = inlined_call_operand.vmem [shape: f32[16,128], index: 2, kind: input, shape index: {}]
  %s3 = inlined_call_operand.hbm [shape: bf16[128,128], index: 3, kind: input, shape index: {}]
  %s4 = inlined_call_operand.vmem [shape: f32[1,128], index: 4, kind: input, shape index: {}]
  %s5 = inlined_call_operand.hbm [shape: f32[16,128], index: 5, kind: output, shape index: {}]
  %s6 = sld [smem:[#allocation0]]
  $region38: #{tpu_custom_call.1} parent=0
    _
  %s8 = ssub.s32 1, %s6
  %s9 = scalar_select 0, %s8, %s6
  $region1: #{tpu_custom_call.1} parent=0
    #allocation2 [shape = 'u8[32768]{0}', space=vmem, size = 0x8000, scoped, tag = 'input window, operand 1, single buffered']
    #allocation3 [shape = 's32[1]{0}', space=sflag, size = 0x4, scoped, tag = 'scoped memory for tpu_custom_call.1']
    #allocation4 [shape = 's32[1]{0}', space=sflag, size = 0x4, scoped, tag = 'scoped memory for tpu_custom_call.1']
    #allocation5 [shape = 'u8[32768]{0}', space=vmem, size = 0x8000, scoped, tag = 'input window, operand 3, single buffered']
    #allocation6 [shape = 's32[1]{0}', space=sflag, size = 0x4, scoped, tag = 'scoped memory for tpu_custom_call.1']
    #allocation7 [shape = 'u8[8192]{0}', space=vmem, size = 0x2000, scoped, tag = 'output window, operand 0, single buffered']
    %10 = vsyncpa [#allocation3], 0
    %11 = vsyncpa [#allocation6], 0
    %12 = vsyncpa [#allocation4], 0
    // Predicated region
    $region2: #{tpu_custom_call.1} parent=1 // pred_check
      _
    $region3: #{tpu_custom_call.1} parent=1 // pred_check_branch
      %14 = sbr.rel (0) target = $region5
    $region4: #{tpu_custom_call.1} parent=1 // pred_region
      _
    $region5: #{tpu_custom_call.1} parent=1 // pred_fallthru
      _
    // Predicated region
    $region6: #{tpu_custom_call.1} parent=1 // pred_check
      _
    $region7: #{tpu_custom_call.1} parent=1 // pred_check_branch
      %16 = sbr.rel (0) target = $region9
    $region8: #{tpu_custom_call.1} parent=1 // pred_region
      %18 = vsyncadd [#allocation3], 0
      %s19 = sshll.u32 %s1, 4
      %s20 = int_to_ptr.hbm [resolvable:$true] %s19
      %s21 = sshll.u32 [#allocation2], 4
      %s22 = int_to_ptr.vmem [resolvable:$true] %s21
      %27 = dma.hbm_to_vmem [thread:$0]  %s20, 1024, %s22, [#allocation3], 64, 64, 4
    $region9: #{tpu_custom_call.1} parent=1 // pred_fallthru
      _
    // Predicated region
    $region10: #{tpu_custom_call.1} parent=1 // pred_check
      _
    $region11: #{tpu_custom_call.1} parent=1 // pred_check_branch
      %29 = sbr.rel (0) target = $region13
    $region12: #{tpu_custom_call.1} parent=1 // pred_region
      _
    $region13: #{tpu_custom_call.1} parent=1 // pred_fallthru
      _
    // Predicated region
    $region14: #{tpu_custom_call.1} parent=1 // pred_check
      _
    $region15: #{tpu_custom_call.1} parent=1 // pred_check_branch
      %31 = sbr.rel (0) target = $region17
    $region16: #{tpu_custom_call.1} parent=1 // pred_region
      %33 = vsyncadd [#allocation6], 0
      %s34 = sshll.u32 %s3, 4
      %s35 = int_to_ptr.hbm [resolvable:$true] %s34
      %s36 = sshll.u32 [#allocation5], 4
      %s37 = int_to_ptr.vmem [resolvable:$true] %s36
      %42 = dma.hbm_to_vmem [thread:$0]  %s35, 1024, %s37, [#allocation6], 64, 64, 4
    $region17: #{tpu_custom_call.1} parent=1 // pred_fallthru
      _
    // Predicated region
    $region18: #{tpu_custom_call.1} parent=1 // pred_check
      _
    $region19: #{tpu_custom_call.1} parent=1 // pred_check_branch
      %44 = sbr.rel (0) target = $region21
    $region20: #{tpu_custom_call.1} parent=1 // pred_region
      _
    $region21: #{tpu_custom_call.1} parent=1 // pred_fallthru
      _
    // Predicated region
    $region22: #{tpu_custom_call.1} parent=1 // pred_check
      _
    $region23: #{tpu_custom_call.1} parent=1 // pred_check_branch
      %46 = sbr.rel (0) target = $region25
    $region24: #{tpu_custom_call.1} parent=1 // pred_region
      %48 = dma.done [#allocation3], 1024
    $region25: #{tpu_custom_call.1} parent=1 // pred_fallthru
      _
    // Predicated region
    $region26: #{tpu_custom_call.1} parent=1 // pred_check
      _
    $region27: #{tpu_custom_call.1} parent=1 // pred_check_branch
      %50 = sbr.rel (0) target = $region29
    $region28: #{tpu_custom_call.1} parent=1 // pred_region
      %52 = dma.done [#allocation6], 1024
    $region29: #{tpu_custom_call.1} parent=1 // pred_fallthru
      _
    %v53 = vld [vmem:[%s0] sm:$0xff]
    %v54 = vld [vmem:[%s0 + $0x8] sm:$0xff]
    %v55 = vlaneseq
    %v56 = vand.u32 %v55, 127
    %57 = vset.pattern.permute.xlu0 0
    %58 = vperm.xlu0 %57, %v53
    %v59 = vpop.permute.xlu0 %58
    %60 = vset.pattern.permute.xlu0 0
    %61 = vperm.xlu0 %60, %v54
    %v62 = vpop.permute.xlu0 %61
    %vm63 = vcmp.eq.s32.totalorder %v59, %v56
    %vm64 = vcmp.eq.s32.totalorder %v62, %v56
    %v65 = vsel %vm63, 1.0, 0.0
    %v66 = vsel %vm64, 1.0, 0.0
    %v67 = vpack.c.bf16 %v66, %v65
    %v68 = vld [vmem:[#allocation2] sm:$0xf]
    %v69 = vld [vmem:[#allocation2 + $0x4] sm:$0xf]
    %v70 = vld [vmem:[#allocation2 + $0x8] sm:$0xf]
    %v71 = vld [vmem:[#allocation2 + $0xc] sm:$0xf]
    %v72 = vld [vmem:[#allocation2 + $0x10] sm:$0xf]
    %v73 = vld [vmem:[#allocation2 + $0x14] sm:$0xf]
    %v74 = vld [vmem:[#allocation2 + $0x18] sm:$0xf]
    %v75 = vld [vmem:[#allocation2 + $0x1c] sm:$0xf]
    %v76 = vld [vmem:[#allocation2 + $0x20] sm:$0xf]
    %v77 = vld [vmem:[#allocation2 + $0x24] sm:$0xf]
    %v78 = vld [vmem:[#allocation2 + $0x28] sm:$0xf]
    %v79 = vld [vmem:[#allocation2 + $0x2c] sm:$0xf]
    %v80 = vld [vmem:[#allocation2 + $0x30] sm:$0xf]
    %v81 = vld [vmem:[#allocation2 + $0x34] sm:$0xf]
    %v82 = vld [vmem:[#allocation2 + $0x38] sm:$0xf]
    %v83 = vld [vmem:[#allocation2 + $0x3c] sm:$0xf]
    %v84 = vld [vmem:[%s2] sm:$0xff]
    %v85 = vld [vmem:[%s2 + $0x8] sm:$0xff]
    %v102 = vunpack.c.l.b16 %v68
    %v103 = vunpack.c.l.b16 %v69
    %v104 = vunpack.c.l.b16 %v70
    %v105 = vunpack.c.l.b16 %v71
    %v106 = vunpack.c.l.b16 %v72
    %v107 = vunpack.c.l.b16 %v73
    %v108 = vunpack.c.l.b16 %v74
    %v109 = vunpack.c.l.b16 %v75
    %v110 = vunpack.c.l.b16 %v76
    %v111 = vunpack.c.l.b16 %v77
    %v112 = vunpack.c.l.b16 %v78
    %v113 = vunpack.c.l.b16 %v79
    %v114 = vunpack.c.l.b16 %v80
    %v115 = vunpack.c.l.b16 %v81
    %v116 = vunpack.c.l.b16 %v82
    %v117 = vunpack.c.l.b16 %v83
    %v118 = vpack.c.b16 %v103, %v102
    %v119 = vpack.c.b16 %v105, %v104
    %v120 = vpack.c.b16 %v107, %v106
    %v121 = vpack.c.b16 %v109, %v108
    %v122 = vpack.c.b16 %v111, %v110
    %v123 = vpack.c.b16 %v113, %v112
    %v124 = vpack.c.b16 %v115, %v114
    %v125 = vpack.c.b16 %v117, %v116
    %134 = vmatpush.bf16.msra.mxu0 %v125
    %135 = vmatpush.bf16.msra.mxu0 %v124
    %136 = vmatpush.bf16.msra.mxu0 %v123
    %137 = vmatpush.bf16.msra.mxu0 %v122
    %138 = vmatpush.bf16.msra.mxu0 %v121
    %139 = vmatpush.bf16.msra.mxu0 %v120
    %140 = vmatpush.bf16.msra.mxu0 %v119
    %141 = vmatpush.bf16.msra.mxu0 %v118
    %142 = vmatmul.bf16.gmra.mxu0 %v67
    %v143 = vpop.f32.mrf.mxu0
    %v144 = vadd.f32 %v84, %v143
    %v145 = vpop.f32.mrf.mxu0
    %v146 = vadd.f32 %v85, %v145
    %147 = vdwg.mxu0
    %v148 = vpack.c.bf16 %v146, %v144
    %v149 = vld [vmem:[#allocation5] sm:$0xf]
    %v150 = vld [vmem:[#allocation5 + $0x4] sm:$0xf]
    %v151 = vld [vmem:[#allocation5 + $0x8] sm:$0xf]
    %v152 = vld [vmem:[#allocation5 + $0xc] sm:$0xf]
    %v153 = vld [vmem:[#allocation5 + $0x10] sm:$0xf]
    %v154 = vld [vmem:[#allocation5 + $0x14] sm:$0xf]
    %v155 = vld [vmem:[#allocation5 + $0x18] sm:$0xf]
    %v156 = vld [vmem:[#allocation5 + $0x1c] sm:$0xf]
    %v157 = vld [vmem:[#allocation5 + $0x20] sm:$0xf]
    %v158 = vld [vmem:[#allocation5 + $0x24] sm:$0xf]
    %v159 = vld [vmem:[#allocation5 + $0x28] sm:$0xf]
    %v160 = vld [vmem:[#allocation5 + $0x2c] sm:$0xf]
    %v161 = vld [vmem:[#allocation5 + $0x30] sm:$0xf]
    %v162 = vld [vmem:[#allocation5 + $0x34] sm:$0xf]
    %v163 = vld [vmem:[#allocation5 + $0x38] sm:$0xf]
    %v164 = vld [vmem:[#allocation5 + $0x3c] sm:$0xf]
    %v165 = vld [vmem:[%s4] sm:$0x1]
    %v167 = vperm.slane %v165, 0
    %v185 = vunpack.c.l.b16 %v149
    %v186 = vunpack.c.l.b16 %v150
    %v187 = vunpack.c.l.b16 %v151
    %v188 = vunpack.c.l.b16 %v152
    %v189 = vunpack.c.l.b16 %v153
    %v190 = vunpack.c.l.b16 %v154
    %v191 = vunpack.c.l.b16 %v155
    %v192 = vunpack.c.l.b16 %v156
    %v193 = vunpack.c.l.b16 %v157
    %v194 = vunpack.c.l.b16 %v158
    %v195 = vunpack.c.l.b16 %v159
    %v196 = vunpack.c.l.b16 %v160
    %v197 = vunpack.c.l.b16 %v161
    %v198 = vunpack.c.l.b16 %v162
    %v199 = vunpack.c.l.b16 %v163
    %v200 = vunpack.c.l.b16 %v164
    %v201 = vpack.c.b16 %v186, %v185
    %v202 = vpack.c.b16 %v188, %v187
    %v203 = vpack.c.b16 %v190, %v189
    %v204 = vpack.c.b16 %v192, %v191
    %v205 = vpack.c.b16 %v194, %v193
    %v206 = vpack.c.b16 %v196, %v195
    %v207 = vpack.c.b16 %v198, %v197
    %v208 = vpack.c.b16 %v200, %v199
    %217 = vmatpush.bf16.msra.mxu0 %v208
    %218 = vmatpush.bf16.msra.mxu0 %v207
    %219 = vmatpush.bf16.msra.mxu0 %v206
    %220 = vmatpush.bf16.msra.mxu0 %v205
    %221 = vmatpush.bf16.msra.mxu0 %v204
    %222 = vmatpush.bf16.msra.mxu0 %v203
    %223 = vmatpush.bf16.msra.mxu0 %v202
    %224 = vmatpush.bf16.msra.mxu0 %v201
    %225 = vmatmul.bf16.gmra.mxu0 %v148
    %v226 = vpop.f32.mrf.mxu0
    %v227 = vadd.f32 %v167, %v226
    %v228 = vpop.f32.mrf.mxu0
    %v229 = vadd.f32 %v167, %v228
    %230 = vdwg.mxu0
    %231 = vst [vmem:[#allocation7] sm:$0xff] %v227
    %232 = vst [vmem:[#allocation7 + $0x8] sm:$0xff] %v229
    // Predicated region
    $region30: #{tpu_custom_call.1} parent=1 // pred_check
      _
    $region31: #{tpu_custom_call.1} parent=1 // pred_check_branch
      %234 = sbr.rel (0) target = $region33
    $region32: #{tpu_custom_call.1} parent=1 // pred_region
      %236 = vsyncadd [#allocation4], 0
      %s237 = sshll.u32 [#allocation7], 4
      %s238 = int_to_ptr.vmem [resolvable:$true] %s237
      %s239 = sshll.u32 %s5, 4
      %s240 = int_to_ptr.hbm [resolvable:$true] %s239
      %245 = dma.vmem_to_hbm [thread:$0]  %s238, 256, %s240, [#allocation4], 128, 128, 8
    $region33: #{tpu_custom_call.1} parent=1 // pred_fallthru
      _
    // Predicated region
    $region34: #{tpu_custom_call.1} parent=1 // pred_check
      _
    $region35: #{tpu_custom_call.1} parent=1 // pred_check_branch
      %247 = sbr.rel (0) target = $region37
    $region36: #{tpu_custom_call.1} parent=1 // pred_region
      %249 = dma.done [#allocation4], 256
    $region37: #{tpu_custom_call.1} parent=1 // pred_fallthru
      _
    %250 = vsyncpa [#allocation3], 1
    %251 = vsyncpa [#allocation6], 1
    %252 = vsyncpa [#allocation4], 1

</llo_original>
